<compile_context>
chip_gen: v5e
topology: v5e:2x2
jax: 0.10.0
libtpu: 0.0.40
codegen_flags: <defaults>
</compile_context>

<pallas_src>
import jax
import jax.numpy as jnp
import numpy as np
from jax.experimental import pallas as pl
from jax.experimental.pallas import tpu as pltpu


# ------------------------------ Tiling helpers ------------------------------

def _pick_fold(c: int, hw: int) -> int:
    """Fold factor f so C*f fills the 8 sublanes of a vreg (C*f % 8 == 0)."""
    if c % 8 == 0:
        return 1
    for f in (2, 4, 8):
        if (c * f) % 8 == 0 and hw % f == 0:
            return f
    return 1


def _pick_tile(hw: int, c_rows: int, dtype_bytes: int,
               vmem_budget: int = 6 * 1024 * 1024) -> int:
    """Largest power-of-two lane tile (multiple of 128) that divides hw while the
    double-buffered working set (3-branch input + output tiles) fits the budget."""
    per_lane = 2 * (3 * c_rows + c_rows) * max(dtype_bytes, 4)
    cap = max(128, vmem_budget // per_lane)
    if hw % 128 != 0:
        return hw                      # single full-extent tile (still valid)
    t = 128
    while t * 2 <= cap and hw % (t * 2) == 0:
        t *= 2
    return t


# ----------------------------- Pass 1: pooling ------------------------------

def _pool_kernel(x_ref, s_ref):
    # x_ref: (3, C', T)  -- one HW tile of the 3 branches for one batch.
    # s_ref: (C', 1) f32 -- resident accumulator across the HW-tile axis.
    @pl.when(pl.program_id(1) == 0)
    def _():
        s_ref[...] = jnp.zeros_like(s_ref)

    z = (x_ref[0].astype(jnp.float32)
         + x_ref[1].astype(jnp.float32)
         + x_ref[2].astype(jnp.float32))                     # (C', T)
    s_ref[...] += jnp.sum(z, axis=-1, keepdims=True)         # (C', 1)


# ------------------------------ Pass 3: apply -------------------------------

def _apply_kernel(att_ref, x_ref, o_ref):
    # att_ref: (3, C', 1) f32 softmax attention for this batch.
    # x_ref  : (3, C', T) input tile.   o_ref: (C', T) output tile.
    # Branches are read from the ref and consumed immediately to keep vreg
    # live ranges short (no big intermediates held across phases).
    acc = att_ref[0] * x_ref[0]
    acc = acc + att_ref[1] * x_ref[1]
    acc = acc + att_ref[2] * x_ref[2]
    o_ref[...] = acc.astype(o_ref.dtype)


# -------------------------------- Wrapper -----------------------------------

def skff_pallas(x_stacked, w1, w2, alpha):
    """x_stacked: (B, 3, C, H, W).  w1: (D, C).  w2: (3C, D).  Returns (B, C, H, W)."""
    B, K, C, H, W = x_stacked.shape
    assert K == 3
    HW = H * W

    # Sublane fold: (C, HW) -> (C*f, HW/f) contiguous view so tiles use all
    # 8 sublanes even when C < 8 (e.g. C = 4).
    f = _pick_fold(C, HW)
    Cp, HWp = C * f, HW // f
    dtype_bytes = jnp.dtype(x_stacked.dtype).itemsize
    T = _pick_tile(HWp, Cp, dtype_bytes)
    n_tiles = HWp // T

    x_flat = x_stacked.reshape(B, 3, Cp, HWp)   # free row-major view

    # Pass 1: branch-sum + global average pool, tiled over HW.
    sums = pl.pallas_call(
        _pool_kernel,
        out_shape=jax.ShapeDtypeStruct((B, Cp, 1), jnp.float32),
        grid_spec=pltpu.PrefetchScalarGridSpec(
            num_scalar_prefetch=0,
            grid=(B, n_tiles),
            in_specs=[
                pl.BlockSpec((None, 3, Cp, T), lambda b, t: (b, 0, 0, t)),
            ],
            out_specs=pl.BlockSpec((None, Cp, 1), lambda b, t: (b, 0, 0)),
        ),
        compiler_params=pltpu.CompilerParams(
            dimension_semantics=("parallel", "arbitrary")),
    )(x_flat)
    # Undo the fold (sum the f row-chunks of each channel) and average.
    pooled = sums[:, :, 0].reshape(B, C, f).sum(axis=-1) * (1.0 / HW)   # (B, C)

    # Pass 2 (plain JAX): C->D conv + PReLU, 3x(D->C) conv, branch softmax.
    zd = pooled @ w1.T                                       # (B, D)
    zd = jnp.where(zd >= 0, zd, alpha * zd)                  # PReLU
    logits = (zd @ w2.T).reshape(B, 3, C)                    # (B, 3, C)
    att = jax.nn.softmax(logits, axis=1).astype(jnp.float32) # softmax over branches
    att = jnp.repeat(att, f, axis=2)[..., None]              # (B, 3, C', 1)

    # Pass 3: recalibrate and merge, tiled over HW, both grid axes parallel.
    out = pl.pallas_call(
        _apply_kernel,
        out_shape=jax.ShapeDtypeStruct((B, Cp, HWp), x_stacked.dtype),
        grid_spec=pltpu.PrefetchScalarGridSpec(
            num_scalar_prefetch=0,
            grid=(B, n_tiles),
            in_specs=[
                pl.BlockSpec((None, 3, Cp, 1), lambda b, t: (b, 0, 0, 0)),
                pl.BlockSpec((None, 3, Cp, T), lambda b, t: (b, 0, 0, t)),
            ],
            out_specs=pl.BlockSpec((None, Cp, T), lambda b, t: (b, 0, t)),
        ),
        compiler_params=pltpu.CompilerParams(
            dimension_semantics=("parallel", "parallel")),
    )(att, x_flat)
    return out.reshape(B, C, H, W)


def skff_reference(x_stacked, w1, w2, alpha):
    """Pure-JAX reference matching the PyTorch forward."""
    z = x_stacked.sum(axis=1)                       # (B, C, H, W)
    pooled = z.mean(axis=(2, 3))                    # (B, C)
    zd = pooled @ w1.T                              # (B, D)
    zd = jnp.where(zd >= 0, zd, alpha * zd)         # PReLU
    B, _, C, _, _ = x_stacked.shape
    logits = (zd @ w2.T).reshape(B, 3, C)           # (B, 3, C)
    att = jax.nn.softmax(logits, axis=1)            # softmax over branch dim
    return (x_stacked * att[..., None, None]).sum(axis=1)


if __name__ == "__main__":
    # Module config: in_channels=4, reduction_ratio=2 -> D = max(4//2, 4) = 4
    B, C, H, W = 2, 4, 16, 16
    reduction_ratio = 2
    D = max(int(C / reduction_ratio), 4)

    key = jax.random.PRNGKey(0)
    k_x, k_w1, k_w2 = jax.random.split(key, 3)

    # Three input feature maps (the three resolutions), stacked on a branch dim.
    x_stacked = jax.random.normal(k_x, (B, 3, C, H, W), dtype=jnp.float32)

    # Deterministic synthetic parameters (bias=False in the module).
    w1 = (jax.random.normal(k_w1, (D, C), dtype=jnp.float32)
          * (1.0 / np.sqrt(C)))                       # Conv1x1 C->D weight
    w2 = (jax.random.normal(k_w2, (3 * C, D), dtype=jnp.float32)
          * (1.0 / np.sqrt(D)))                       # 3 stacked Conv1x1 D->C weights
    alpha = 0.25                                      # nn.PReLU default init

    out = skff_pallas(x_stacked, w1, w2, alpha)
    out = jax.block_until_ready(out)

    ref = skff_reference(x_stacked, w1, w2, alpha)
    np.testing.assert_allclose(np.asarray(out), np.asarray(ref),
                               rtol=1e-5, atol=1e-5)
    print("KERNEL_OK")
</pallas_src>

<mosaic_0001>
module attributes {stable_mosaic.version = 11 : i64} {
  func.func @_pool_kernel(%arg0: i32, %arg1: i32, %arg2: memref<1x3x8x128xf32, #tpu.memory_space<vmem>>, %arg3: memref<1x8x1xf32, #tpu.memory_space<vmem>>) attributes {dimension_semantics = [#tpu.dimension_semantics<parallel>, #tpu.dimension_semantics<arbitrary>], iteration_bounds = array<i64: 2, 1>, scalar_prefetch = 0 : i64, scratch_operands = 0 : i64, tpu.core_type = #tpu.core_type<tc>, window_params = [{transform_indices = @transform_0, window_bounds = array<i64: 1, 3, 8, 128>}, {transform_indices = @transform_1, window_bounds = array<i64: 1, 8, 1>}]} {
    %c0_i32 = arith.constant 0 : i32
    %0 = arith.cmpi eq, %arg1, %c0_i32 : i32
    %1 = arith.extui %0 : i1 to i32
    %c0_i32_0 = arith.constant 0 : i32
    %2 = arith.cmpi ne, %1, %c0_i32_0 : i32
    scf.if %2 {
      %cst_16 = arith.constant 0.000000e+00 : f32
      %19 = vector.broadcast %cst_16 : f32 to vector<8x1xf32>
      %c0_17 = arith.constant 0 : index
      %c0_18 = arith.constant 0 : index
      %c0_19 = arith.constant 0 : index
      %20 = vector.load %arg3[%c0_17, %c0_18, %c0_19] : memref<1x8x1xf32, #tpu.memory_space<vmem>>, vector<1x8x1xf32>
      %21 = vector.shape_cast %20 : vector<1x8x1xf32> to vector<8x1xf32>
      %22 = vector.shape_cast %19 : vector<8x1xf32> to vector<1x8x1xf32>
      tpu.vector_store %arg3[%c0_17, %c0_18, %c0_19], %22 {strides = array<i32>} : memref<1x8x1xf32, #tpu.memory_space<vmem>>, vector<1x8x1xf32>,
    } else {
    }
    %c0 = arith.constant 0 : index
    %c0_1 = arith.constant 0 : index
    %c0_2 = arith.constant 0 : index
    %c0_3 = arith.constant 0 : index
    %3 = vector.load %arg2[%c0, %c0_1, %c0_2, %c0_3] : memref<1x3x8x128xf32, #tpu.memory_space<vmem>>, vector<1x1x8x128xf32>
    %4 = vector.shape_cast %3 : vector<1x1x8x128xf32> to vector<8x128xf32>
    %c0_4 = arith.constant 0 : index
    %c1 = arith.constant 1 : index
    %c0_5 = arith.constant 0 : index
    %c0_6 = arith.constant 0 : index
    %5 = vector.load %arg2[%c0_4, %c1, %c0_5, %c0_6] : memref<1x3x8x128xf32, #tpu.memory_space<vmem>>, vector<1x1x8x128xf32>
    %6 = vector.shape_cast %5 : vector<1x1x8x128xf32> to vector<8x128xf32>
    %7 = arith.addf %4, %6 : vector<8x128xf32>
    %c0_7 = arith.constant 0 : index
    %c2 = arith.constant 2 : index
    %c0_8 = arith.constant 0 : index
    %c0_9 = arith.constant 0 : index
    %8 = vector.load %arg2[%c0_7, %c2, %c0_8, %c0_9] : memref<1x3x8x128xf32, #tpu.memory_space<vmem>>, vector<1x1x8x128xf32>
    %9 = vector.shape_cast %8 : vector<1x1x8x128xf32> to vector<8x128xf32>
    %10 = arith.addf %7, %9 : vector<8x128xf32>
    %c0_10 = arith.constant 0 : index
    %c0_11 = arith.constant 0 : index
    %c0_12 = arith.constant 0 : index
    %11 = vector.load %arg3[%c0_10, %c0_11, %c0_12] : memref<1x8x1xf32, #tpu.memory_space<vmem>>, vector<1x8x1xf32>
    %12 = vector.shape_cast %11 : vector<1x8x1xf32> to vector<8x1xf32>
    %cst = arith.constant dense<0.000000e+00> : vector<8xf32>
    %13 = vector.multi_reduction <add>, %10, %cst [1] : vector<8x128xf32> to vector<8xf32>
    %14 = vector.shape_cast %13 : vector<8xf32> to vector<8x1xf32>
    %15 = arith.addf %12, %14 : vector<8x1xf32>
    %c0_13 = arith.constant 0 : index
    %c0_14 = arith.constant 0 : index
    %c0_15 = arith.constant 0 : index
    %16 = vector.load %arg3[%c0_13, %c0_14, %c0_15] : memref<1x8x1xf32, #tpu.memory_space<vmem>>, vector<1x8x1xf32>
    %17 = vector.shape_cast %16 : vector<1x8x1xf32> to vector<8x1xf32>
    %18 = vector.shape_cast %15 : vector<8x1xf32> to vector<1x8x1xf32>
    tpu.vector_store %arg3[%c0_13, %c0_14, %c0_15], %18 {strides = array<i32>} : memref<1x8x1xf32, #tpu.memory_space<vmem>>, vector<1x8x1xf32>,
    return
  }
  func.func @transform_0(%arg0: i32, %arg1: i32) -> (i32, i32, i32, i32) {
    %c0_i32 = arith.constant 0 : i32
    %c0_i32_0 = arith.constant 0 : i32
    %c0_i32_1 = arith.constant 0 : i32
    return %arg0, %c0_i32, %c0_i32_0, %arg1 : i32, i32, i32, i32
  }
  func.func @transform_1(%arg0: i32, %arg1: i32) -> (i32, i32, i32) {
    %c0_i32 = arith.constant 0 : i32
    %c0_i32_0 = arith.constant 0 : i32
    %c0_i32_1 = arith.constant 0 : i32
    return %arg0, %c0_i32, %c0_i32_0 : i32, i32, i32
  }
}

</mosaic_0001>

<llo_original>
// kernel: tpu_custom_call.1
$region0: #{tpu_custom_call.1}
  #allocation0 [shape = 'u32[]', space=smem, size = 0x4, offset = 0x4, fixed_abs, tag = 'smem constant byte address 0x4 - core index']
  #allocation1 [shape = 'u32[72,128]{1,0:T(1,128)}', space=vmem, size = 0x9000, scoped, tag = 'internal scratch']
  %s0 = inlined_call_operand.hbm [shape: f32[2,3,8,128], index: 0, kind: input, shape index: {}]
  %s1 = inlined_call_operand.vmem [shape: f32[2,8,1], index: 1, kind: output, shape index: {}]
  %s2 = sld [smem:[#allocation0]]
  $region45: #{tpu_custom_call.1} parent=0
    _
  %s4 = ssub.s32 1, %s2
  %s5 = scalar_select 0, %s4, %s2
  $region1: #{tpu_custom_call.1} parent=0
    #allocation2 [shape = 'u8[24576]{0}', space=vmem, size = 0x6000, scoped, tag = 'input window, operand 0']
    #allocation3 [shape = 's32[2]{0}', space=sflag, size = 0x8, scoped, tag = 'scoped memory for tpu_custom_call.1']
    %6 = vsyncpa [#allocation3], 0
    %s7 = scalar_lea.sflag [#allocation3], 1
    %8 = vsyncpa %s7, 0
    loop: start=0, step=1, limit=4
    $region2: #{tpu_custom_call.1} parent=1 // loop_pre_header
      _
    $region3: #{tpu_custom_call.1} parent=1 // loop_header
      %s10 = sphi 0, %s14
      %p11 = scmp.ge.s32.totalorder %s10, 4
      %s17 = sphi 0, %s29
      %s18 = sphi 0, %s25
      %s19 = sphi 0, %s17
      %s20 = sphi 0, %s18
      %s21 = sphi 0, %s19
      %s22 = sphi 0, %s20
      %s34 = sphi 0, %s36
      %s37 = sphi 0, %s34
      %s38 = sphi 0, %s37
      %s54 = sphi 0, %s38
      %s60 = sphi 0, %s62
      %s63 = sphi 0, %s60
      %s64 = sphi 0, %s63
      %s80 = sphi 0, %s64
    $region4: #{tpu_custom_call.1} parent=1 // loop_header_branch
      %13 = sbr.rel (%p11) target = $region8
    $region5: #{tpu_custom_call.1} parent=1 // loop_body
      %s15 = ssub.s32 %s10, 1
      %s16 = ssub.s32 %s10, 2
      %s23 = sadd.s32 1, %s18
      %p24 = scmp.ge.s32.totalorder %s23, 1
      %s25 = scalar_select %p24, 0, %s23
      %s26 = sadd.s32 1, %s17
      %s27 = scalar_select %p24, %s26, %s17
      %p28 = scmp.ge.s32.totalorder %s27, 2
      %s29 = scalar_select %p28, 0, %s27
      %s30 = ssub.s32 %s17, %s29
      %s31 = ssub.s32 %s18, %s25
      %s32 = sor.u32 %s30, %s31
      %p33 = scmp.eq.s32.totalorder %s32, 0
      %s35 = sadd.s32 %s34, 1
      %s36 = scalar_select %p33, %s34, %s35
      %p39 = pneg %p33
      %p40 = scmp.eq.s32.totalorder %s10, 1
      %p41 = por %p39, %p40
      %p42 = scmp.ne.s32.totalorder %s34, %s37
      %p43 = scmp.eq.s32.totalorder %s10, 0
      %p44 = por %p42, %p43
      %p45 = scmp.ne.s32.totalorder %s34, %s37
      %p46 = scmp.eq.s32.totalorder %s15, 1
      %p47 = por %p45, %p46
      %p48 = scmp.ne.s32.totalorder %s37, %s38
      %p49 = scmp.eq.s32.totalorder %s15, 0
      %p50 = por %p48, %p49
      %p51 = scmp.ne.s32.totalorder %s37, %s38
      %p52 = scmp.eq.s32.totalorder %s16, 1
      %p53 = por %p51, %p52
      %p55 = scmp.ne.s32.totalorder %s38, %s54
      %p56 = scmp.eq.s32.totalorder %s16, 0
      %p57 = por %p55, %p56
      %s58 = ssub.s32 %s17, %s29
      %p59 = scmp.eq.s32.totalorder %s58, 0
      %s61 = sadd.s32 %s60, 1
      %s62 = scalar_select %p59, %s60, %s61
      %p65 = pneg %p59
      %p66 = scmp.eq.s32.totalorder %s10, 1
      %p67 = por %p65, %p66
      %p68 = scmp.ne.s32.totalorder %s60, %s63
      %p69 = scmp.eq.s32.totalorder %s10, 0
      %p70 = por %p68, %p69
      %p71 = scmp.ne.s32.totalorder %s60, %s63
      %p72 = scmp.eq.s32.totalorder %s15, 1
      %p73 = por %p71, %p72
      %p74 = scmp.ne.s32.totalorder %s63, %s64
      %p75 = scmp.eq.s32.totalorder %s15, 0
      %p76 = por %p74, %p75
      %p77 = scmp.ne.s32.totalorder %s63, %s64
      %p78 = scmp.eq.s32.totalorder %s16, 1
      %p79 = por %p77, %p78
      %p81 = scmp.ne.s32.totalorder %s64, %s80
      %p82 = scmp.eq.s32.totalorder %s16, 0
      %p83 = por %p81, %p82
      %p84 = scmp.le.s32.totalorder 1, %s10
      %p85 = scmp.lt.s32.totalorder %s10, 3
      %p86 = pnand %p84, %p85
      %p87 = pneg %p86
      // Predicated region
      $region9: #{tpu_custom_call.1} parent=5 // pred_check
        _
      $region10: #{tpu_custom_call.1} parent=5 // pred_check_branch
        %89 = sbr.rel (%p86) target = $region12
      $region11: #{tpu_custom_call.1} parent=5 // pred_region
        %s90 = ssub.s32 %s10, 1
      $region12: #{tpu_custom_call.1} parent=5 // pred_fallthru
        _
      %p91 = scmp.lt.s32.totalorder %s10, 2
      // Predicated region
      $region13: #{tpu_custom_call.1} parent=5 // pred_check
        %p92 = pneg %p91
      $region14: #{tpu_custom_call.1} parent=5 // pred_check_branch
        %94 = sbr.rel (%p92) target = $region16
      $region15: #{tpu_custom_call.1} parent=5 // pred_region
        // Predicated region
        $region17: #{tpu_custom_call.1} parent=15 // pred_check
          %p95 = pneg %p44
        $region18: #{tpu_custom_call.1} parent=15 // pred_check_branch
          %97 = sbr.rel (%p95) target = $region20
        $region19: #{tpu_custom_call.1} parent=15 // pred_region
          %s98 = sand.u32 %s34, 1
          %s99 = scalar_lea.sflag [#allocation3], %s98
          %s100 = sand.u32 %s34, 1
          %s101 = smul.addr %s100, 24
          %s102 = scalar_lea.vmem [#allocation2], %s101
          %104 = vsyncadd %s99, 0
          %s105 = smul.addr %s17, 3
          %s106 = sadd.s32 %s18, %s105
          %s107 = smul.addr %s106, 8
          %s108 = scalar_lea.hbm %s0, %s107
          %s109 = sshll.u32 %s108, 4
          %s110 = int_to_ptr.hbm [resolvable:$true] %s109
          %s111 = sshll.u32 %s102, 4
          %s112 = int_to_ptr.vmem [resolvable:$true] %s111
          %117 = dma.hbm_to_vmem [thread:$0]  %s110, 384, %s112, %s99, 128, 128, 8
        $region20: #{tpu_custom_call.1} parent=15 // pred_fallthru
          _
      $region16: #{tpu_custom_call.1} parent=5 // pred_fallthru
        _
      %p118 = scmp.le.s32.totalorder 1, %s10
      %p119 = scmp.lt.s32.totalorder %s10, 3
      %p120 = pnand %p118, %p119
      %p121 = pneg %p120
      // Predicated region
      $region21: #{tpu_custom_call.1} parent=5 // pred_check
        _
      $region22: #{tpu_custom_call.1} parent=5 // pred_check_branch
        %123 = sbr.rel (%p120) target = $region24
      $region23: #{tpu_custom_call.1} parent=5 // pred_region
        %s124 = ssub.s32 %s10, 1
        %s125 = sand.u32 %s37, 1
        %s126 = scalar_lea.sflag [#allocation3], %s125
        %s127 = sand.u32 %s37, 1
        %s128 = smul.addr %s127, 24
        %s129 = scalar_lea.vmem [#allocation2], %s128
        // Predicated region
        $region25: #{tpu_custom_call.1} parent=23 // pred_check
          %p130 = pneg %p50
        $region26: #{tpu_custom_call.1} parent=23 // pred_check_branch
          %132 = sbr.rel (%p130) target = $region28
        $region27: #{tpu_custom_call.1} parent=23 // pred_region
          %134 = dma.done %s126, 384
        $region28: #{tpu_custom_call.1} parent=23 // pred_fallthru
          _
        %s135 = sand.u32 %s37, 1
        %s136 = scalar_lea.sflag [#allocation3], %s135
        %s137 = sand.u32 %s37, 1
        %s138 = smul.addr %s137, 24
        %s139 = scalar_lea.vmem [#allocation2], %s138
        %p140 = pneg %p50
        %p141 = pneg %p47
        %p142 = pneg %p76
        %p143 = pneg %p73
        %p144 = scmp.lt.s32.totalorder %s19, 1
        %s145 = scalar_select %p144, %s19, 1
        %s146 = smul.addr %s145, 8
        %s147 = scalar_lea.vmem %s1, %s146
        %p148 = scmp.lt.s32.totalorder %s19, 1
        %s149 = scalar_select %p148, %s19, 1
        %s150 = smul.addr %s149, 8
        %s151 = scalar_lea.vmem %s1, %s150
        %p152 = scmp.eq.s32.totalorder %s20, 0
        // Predicated region
        $region29: #{tpu_custom_call.1} parent=23 // pred_check
          %p153 = pneg %p152
        $region30: #{tpu_custom_call.1} parent=23 // pred_check_branch
          %155 = sbr.rel (%p153) target = $region32
        $region31: #{tpu_custom_call.1} parent=23 // pred_region
          %vm156 = vcmask 7168
          %157 = vst.msk [vmem:[%s151] sm:$0xff] %vm156, 0.0
        $region32: #{tpu_custom_call.1} parent=23 // pred_fallthru
          _
        %v158 = vld [vmem:[%s129] sm:$0xff]
        %s159 = scalar_lea.vmem %s129, 8 [#allocation2]
        %v160 = vld [vmem:[%s159] sm:$0xff]
        %v161 = vadd.f32 %v158, %v160
        %s162 = scalar_lea.vmem %s129, 16 [#allocation2]
        %v163 = vld [vmem:[%s162] sm:$0xff]
        %v164 = vadd.f32 %v161, %v163
        %v165 = vld [vmem:[%s151] sm:$0xff]
        %166 = vadd.xlane.f32.xlu0 %v164
        %v167 = vpop.xlane.xlu0 %166
        %v168 = vadd.f32 %v165, %v167
        %vm169 = vcmask 7168
        %170 = vst.msk [vmem:[%s151] sm:$0xff] %vm169, %v168
        %p171 = scmp.lt.s32.totalorder %s19, 1
        %s172 = scalar_select %p171, %s19, 1
        %s173 = smul.addr %s172, 8
        %s174 = scalar_lea.vmem %s1, %s173
        // Predicated region
        $region33: #{tpu_custom_call.1} parent=23 // pred_check
          %p175 = pneg %p73
        $region34: #{tpu_custom_call.1} parent=23 // pred_check_branch
          %177 = sbr.rel (%p175) target = $region36
        $region35: #{tpu_custom_call.1} parent=23 // pred_region
          _
        $region36: #{tpu_custom_call.1} parent=23 // pred_fallthru
          _
      $region24: #{tpu_custom_call.1} parent=5 // pred_fallthru
        _
      %p178 = scmp.le.s32.totalorder 2, %s10
      // Predicated region
      $region37: #{tpu_custom_call.1} parent=5 // pred_check
        %p179 = pneg %p178
      $region38: #{tpu_custom_call.1} parent=5 // pred_check_branch
        %181 = sbr.rel (%p179) target = $region40
      $region39: #{tpu_custom_call.1} parent=5 // pred_region
        %s182 = ssub.s32 %s10, 2
        // Predicated region
        $region41: #{tpu_custom_call.1} parent=39 // pred_check
          %p183 = pneg %p79
        $region42: #{tpu_custom_call.1} parent=39 // pred_check_branch
          %185 = sbr.rel (%p183) target = $region44
        $region43: #{tpu_custom_call.1} parent=39 // pred_region
          %p186 = scmp.lt.s32.totalorder %s21, 1
          %s187 = scalar_select %p186, %s21, 1
          %s188 = smul.addr %s187, 8
          %s189 = scalar_lea.vmem %s1, %s188
        $region44: #{tpu_custom_call.1} parent=39 // pred_fallthru
          _
      $region40: #{tpu_custom_call.1} parent=5 // pred_fallthru
        _
    $region6: #{tpu_custom_call.1} parent=1 // loop_footer
      %s14 = sadd.s32 1, %s10
    $region7: #{tpu_custom_call.1} parent=1 // loop_footer_branch
      %9 = sbr.rel target = $region3
    $region8: #{tpu_custom_call.1} parent=1 // loop_exit
      _
    %190 = vsyncpa [#allocation3], 1
    %s191 = scalar_lea.sflag [#allocation3], 1
    %192 = vsyncpa %s191, 1

</llo_original>
